<compile_context>
chip_gen: v7x
topology: tpu7x:2x2x1
jax: 0.10.0
libtpu: 0.0.40
codegen_flags: <defaults>
</compile_context>

<pallas_src>
import functools

import jax
import jax.numpy as jnp
from jax.experimental import pallas as pl
from jax.experimental.pallas import tpu as pltpu

NUM_NEIGHBOURS = 5          # config.num_neighbours
DELTA = 1e-3                # inverse-distance kernel delta (see TODO above)


def _dnd_lookup_kernel(q_ref, dk2t_ref, dsq_ref, dvals_ref, out_ref,
                       *, num_neighbours, delta):
    q = q_ref[...]                                   # [TB, K]  f32, mean-centered
    dk2t = dk2t_ref[...]                             # [K, Cp]  (-2 * centered keys)^T
    d_sq = dsq_ref[...]                              # [1, Cp]  ||d||^2, +inf on padded columns

    TB = q.shape[0]
    Cp = dk2t.shape[1]

    # Per-row ordering of squared distances is invariant to adding ||q||^2, so neighbour
    # selection runs on the cheap surrogate  partial = ||d||^2 - 2 q.d, produced by one
    # MXU matmul (the -2 is baked into dk2t at prepare time) + one broadcast add.
    # Padding columns carry +inf in d_sq, so they can never be selected.
    cross = jnp.dot(q, dk2t, preferred_element_type=jnp.float32)      # [TB, Cp] (MXU)
    masked = d_sq + cross                                             # [TB, Cp]

    q_sq = jnp.sum(q * q, axis=1, keepdims=True)                      # [TB, 1]
    col_ids = jax.lax.broadcasted_iota(jnp.int32, (TB, Cp), 1)

    # Lane-dense running state: per-column weight matrix + weight sum.
    W = jnp.zeros((TB, Cp), jnp.float32)
    w_sum = jnp.zeros((TB, 1), jnp.float32)

    # k is small and static -> unrolled iterative top-k (smallest distances).
    for _ in range(num_neighbours):
        min_val = jnp.min(masked, axis=1, keepdims=True)                           # [TB,1] XLU
        sel_idx = jnp.min(jnp.where(masked == min_val, col_ids, Cp),
                          axis=1, keepdims=True)                                   # tie -> lowest idx
        is_sel = col_ids == sel_idx                                                # [TB,Cp]

        # Exact squared distance only for the winner: d2 = surrogate + ||q||^2,
        # clamped against Gram-form cancellation.  All [TB,1]-sized.
        d2 = jnp.maximum(min_val + q_sq, 0.0)
        # NOTE: pl.reciprocal(approx=True) would push this to the EUP slot, but the
        # operand is only [TB,1]; exact divide kept to preserve the 1e-5 atol check.
        w = 1.0 / (d2 + delta)
        w_sum = w_sum + w

        # Fused select: write the weight into the chosen column and knock that column
        # out of the running distances, reusing the same predicate (no one-hot float
        # cast / multiply / add).
        W = jnp.where(is_sel, w, W)
        masked = jnp.where(is_sel, jnp.inf, masked)

    # Single weighted-value reduction on the MXU, then normalize (lane-dense store).
    dv = dvals_ref[...]                                                            # [Cp, Vp]
    out = jnp.dot(W.astype(dv.dtype), dv, preferred_element_type=jnp.float32)      # [TB, Vp]
    out_ref[...] = (out * pl.reciprocal(w_sum, approx=False)).astype(out_ref.dtype)


def _round_up(x, m):
    return ((x + m - 1) // m) * m


def _pick_batch_tile(B):
    """Batch tile: multiple of 8, capped at 128 (vreg pressure of the unrolled top-k),
    and chosen so the grid has >= 2 steps whenever B > 8 (v7x megacore sharding)."""
    if B <= 8:
        return _round_up(max(B, 1), 8)
    return min(128, _round_up((B + 1) // 2, 8))


def prepare_dnd(dict_keys, dict_values, *, values_dtype=jnp.float32):
    """Once-per-dictionary preprocessing (NOT per forward call):
       mean-center the keys (better-conditioned Gram distances for large-magnitude keys,
       e.g. the module's 1e6 init), bake the -2 scale into the transposed keys, precompute
       ||d||^2 with +inf on capacity padding, and pad/transpose values.
       `values_dtype=jnp.bfloat16` is a v6e/v7x option (halves the Cp x Vp HBM/VMEM
       footprint; selection stays f32) — default f32 for exact parity with the reference."""
    C, K = dict_keys.shape
    V = dict_values.shape[1]
    Cp = _round_up(C, 128)
    Vp = _round_up(V, 128)

    dk = dict_keys.astype(jnp.float32)
    key_mean = jnp.mean(dk, axis=0)                                    # [K]
    dk_c = dk - key_mean                                               # centered keys [C, K]

    dk2t = jnp.zeros((K, Cp), jnp.float32).at[:, :C].set((-2.0 * dk_c).T)
    d_sq = jnp.full((1, Cp), jnp.inf, jnp.float32).at[0, :C].set(
        jnp.sum(dk_c * dk_c, axis=1))
    dvp = jnp.zeros((Cp, Vp), values_dtype).at[:C, :V].set(
        dict_values.astype(values_dtype))

    return dict(C=C, K=K, V=V, Cp=Cp, Vp=Vp,
                key_mean=key_mean, dk2t=dk2t, d_sq=d_sq, dvp=dvp)


def dnd_sf_forward(query_keys, dnd, *, num_neighbours=NUM_NEIGHBOURS, delta=DELTA):
    """DND_SF.forward(keys, training=False) — batched lookup against a prepared dictionary."""
    B, K = query_keys.shape
    assert K == dnd["K"]
    assert dnd["C"] >= num_neighbours, "capacity must be >= num_neighbours"

    C, V, Cp, Vp = dnd["C"], dnd["V"], dnd["Cp"], dnd["Vp"]
    TB = _pick_batch_tile(B)
    Bp = _round_up(B, TB)

    # Center queries with the same mean as the dictionary (translation-invariant distances).
    qc = query_keys.astype(jnp.float32) - dnd["key_mean"]
    qp = jnp.zeros((Bp, K), jnp.float32).at[:B, :].set(qc)

    # Scoped-VMEM budget: double-buffered tiles (q, dk2t, d_sq, values, out) + margin.
    itemsize = jnp.dtype(dnd["dvp"].dtype).itemsize
    vmem_bytes = 2 * (TB * K * 4 + K * Cp * 4 + Cp * 4 + Cp * Vp * itemsize + TB * Vp * 4)
    vmem_limit = int(min(max(2 * vmem_bytes, 32 << 20), 64 << 20))

    kernel = functools.partial(_dnd_lookup_kernel,
                               num_neighbours=num_neighbours, delta=delta)
    out = pl.pallas_call(
        kernel,
        out_shape=jax.ShapeDtypeStruct((Bp, Vp), jnp.float32),
        grid=(Bp // TB,),
        in_specs=[
            pl.BlockSpec((TB, K), lambda i: (i, 0)),     # query tile
            pl.BlockSpec((K, Cp), lambda i: (0, 0)),     # (-2 * keys)^T (grid-invariant)
            pl.BlockSpec((1, Cp), lambda i: (0, 0)),     # ||d||^2      (grid-invariant)
            pl.BlockSpec((Cp, Vp), lambda i: (0, 0)),    # values       (grid-invariant)
        ],
        out_specs=pl.BlockSpec((TB, Vp), lambda i: (i, 0)),
        compiler_params=pltpu.CompilerParams(
            dimension_semantics=("parallel",),
            vmem_limit_bytes=vmem_limit),
    )(qp, dnd["dk2t"], dnd["d_sq"], dnd["dvp"])

    return out[:B, :V]


def dnd_sf_reference(query_keys, dict_keys, dict_values,
                     num_neighbours=NUM_NEIGHBOURS, delta=DELTA):
    """Pure-JAX reference mirroring the PyTorch _lookup semantics."""
    sq = jnp.sum((query_keys[:, None, :] - dict_keys[None, :, :]) ** 2, axis=-1)
    _, idxs = jax.lax.top_k(-sq, num_neighbours)                 # k smallest distances
    nb_keys = dict_keys[idxs]                                    # [B, k, K]
    nb_vals = dict_values[idxs]                                  # [B, k, V]
    d2 = jnp.sum((query_keys[:, None, :] - nb_keys) ** 2, axis=2)
    w = 1.0 / (d2 + delta)
    w = w / jnp.sum(w, axis=1, keepdims=True)
    return jnp.sum(w[..., None] * nb_vals, axis=1)


if __name__ == "__main__":
    # Shapes consistent with the module defaults:
    #   dnd_capacity -> 100, key_size -> 8, value_size -> 8, num_neighbours -> 5
    # B=16 so the batch grid has 2 steps (exercises tiling / megacore sharding).
    B, C, K, V = 16, 100, 8, 8

    rng = jax.random.PRNGKey(0)
    k1, k2, k3 = jax.random.split(rng, 3)

    # Module __init__ would give keys = 1e6 * ones and values = zeros ('zeros'
    # psi_init_mode), which makes the forward output identically zero.  To keep
    # the kernel test non-trivial we deterministically initialize the dictionary
    # with random keys and values (psi_init_std = 0.01), same shapes as __init__.
    dict_keys = jax.random.normal(k1, (C, K), jnp.float32)
    dict_values = jax.random.normal(k2, (C, V), jnp.float32) * 0.01
    query_keys = jax.random.normal(k3, (B, K), jnp.float32)

    dnd = prepare_dnd(dict_keys, dict_values)          # once per dictionary update
    out = dnd_sf_forward(query_keys, dnd)
    out = jax.block_until_ready(out)

    ref = dnd_sf_reference(query_keys, dict_keys, dict_values)
    assert out.shape == (B, V)
    assert jnp.allclose(out, ref, atol=1e-5, rtol=1e-4), (out, ref)

    print("KERNEL_OK")
</pallas_src>

<mosaic_0001>
module attributes {stable_mosaic.version = 11 : i64} {
  func.func @_dnd_lookup_kernel(%arg0: i32, %arg1: memref<8x8xf32, #tpu.memory_space<vmem>>, %arg2: memref<8x128xf32, #tpu.memory_space<vmem>>, %arg3: memref<1x128xf32, #tpu.memory_space<vmem>>, %arg4: memref<128x128xf32, #tpu.memory_space<vmem>>, %arg5: memref<8x128xf32, #tpu.memory_space<vmem>>) attributes {dimension_semantics = [#tpu.dimension_semantics<parallel>], iteration_bounds = array<i64: 2>, scalar_prefetch = 0 : i64, scratch_operands = 0 : i64, tpu.core_type = #tpu.core_type<tc>, window_params = [{transform_indices = @transform_0, window_bounds = array<i64: 8, 8>}, {pipeline_mode = #tpu.pipeline_mode<synchronous>, transform_indices = @transform_1, window_bounds = array<i64: 8, 128>}, {pipeline_mode = #tpu.pipeline_mode<synchronous>, transform_indices = @transform_2, window_bounds = array<i64: 1, 128>}, {pipeline_mode = #tpu.pipeline_mode<synchronous>, transform_indices = @transform_3, window_bounds = array<i64: 128, 128>}, {transform_indices = @transform_4, window_bounds = array<i64: 8, 128>}]} {
    %c0 = arith.constant 0 : index
    %c0_0 = arith.constant 0 : index
    %0 = vector.load %arg1[%c0, %c0_0] : memref<8x8xf32, #tpu.memory_space<vmem>>, vector<8x8xf32>
    %c0_1 = arith.constant 0 : index
    %c0_2 = arith.constant 0 : index
    %1 = vector.load %arg2[%c0_1, %c0_2] : memref<8x128xf32, #tpu.memory_space<vmem>>, vector<8x128xf32>
    %c0_3 = arith.constant 0 : index
    %c0_4 = arith.constant 0 : index
    %2 = vector.load %arg3[%c0_3, %c0_4] : memref<1x128xf32, #tpu.memory_space<vmem>>, vector<1x128xf32>
    %cst = arith.constant dense<0.000000e+00> : vector<8x128xf32>
    %3 = tpu.matmul %0, %1, %cst {dimension_numbers = #tpu.dot_dimension_numbers<[1], [0], [0], [1], [0, 0, 1, 1], [], []>} : vector<8x8xf32>, vector<8x128xf32>, vector<8x128xf32> -> vector<8x128xf32>
    %4 = vector.broadcast %2 : vector<1x128xf32> to vector<8x128xf32>
    %5 = arith.addf %4, %3 : vector<8x128xf32>
    %6 = arith.mulf %0, %0 : vector<8x8xf32>
    %cst_5 = arith.constant dense<0.000000e+00> : vector<8xf32>
    %7 = vector.multi_reduction <add>, %6, %cst_5 [1] : vector<8x8xf32> to vector<8xf32>
    %8 = vector.shape_cast %7 : vector<8xf32> to vector<8x1xf32>
    %9 = tpu.iota {dimensions = array<i32: 1>} : vector<8x128xi32>
    %cst_6 = arith.constant 0.000000e+00 : f32
    %10 = vector.broadcast %cst_6 : f32 to vector<8x128xf32>
    %cst_7 = arith.constant 0.000000e+00 : f32
    %11 = vector.broadcast %cst_7 : f32 to vector<8x1xf32>
    %cst_8 = arith.constant dense<0x7F800000> : vector<8xf32>
    %12 = vector.multi_reduction <minimumf>, %5, %cst_8 [1] : vector<8x128xf32> to vector<8xf32>
    %13 = vector.shape_cast %12 : vector<8xf32> to vector<8x1xf32>
    %14 = vector.broadcast %13 : vector<8x1xf32> to vector<8x128xf32>
    %15 = arith.cmpf oeq, %5, %14 : vector<8x128xf32>
    %c128_i32 = arith.constant 128 : i32
    %16 = vector.broadcast %c128_i32 : i32 to vector<8x128xi32>
    %17 = arith.select %15, %9, %16 : vector<8x128xi1>, vector<8x128xi32>
    %cst_9 = arith.constant dense<2147483647> : vector<8xi32>
    %18 = vector.multi_reduction <minsi>, %17, %cst_9 [1] : vector<8x128xi32> to vector<8xi32>
    %19 = vector.shape_cast %18 : vector<8xi32> to vector<8x1xi32>
    %20 = vector.broadcast %19 : vector<8x1xi32> to vector<8x128xi32>
    %21 = arith.cmpi eq, %9, %20 : vector<8x128xi32>
    %22 = arith.addf %13, %8 : vector<8x1xf32>
    %cst_10 = arith.constant 0.000000e+00 : f32
    %23 = vector.broadcast %cst_10 : f32 to vector<8x1xf32>
    %24 = arith.maximumf %22, %23 : vector<8x1xf32>
    %cst_11 = arith.constant 1.000000e-03 : f32
    %25 = vector.broadcast %cst_11 : f32 to vector<8x1xf32>
    %26 = arith.addf %24, %25 : vector<8x1xf32>
    %cst_12 = arith.constant 1.000000e+00 : f32
    %27 = vector.broadcast %cst_12 : f32 to vector<8x1xf32>
    %28 = arith.divf %27, %26 : vector<8x1xf32>
    %29 = arith.addf %11, %28 : vector<8x1xf32>
    %30 = vector.shape_cast %28 : vector<8x1xf32> to vector<8x1xf32>
    %31 = vector.broadcast %30 : vector<8x1xf32> to vector<8x128xf32>
    %32 = arith.select %21, %31, %10 : vector<8x128xi1>, vector<8x128xf32>
    %cst_13 = arith.constant 0x7F800000 : f32
    %33 = vector.broadcast %cst_13 : f32 to vector<8x128xf32>
    %34 = arith.select %21, %33, %5 : vector<8x128xi1>, vector<8x128xf32>
    %cst_14 = arith.constant dense<0x7F800000> : vector<8xf32>
    %35 = vector.multi_reduction <minimumf>, %34, %cst_14 [1] : vector<8x128xf32> to vector<8xf32>
    %36 = vector.shape_cast %35 : vector<8xf32> to vector<8x1xf32>
    %37 = vector.broadcast %36 : vector<8x1xf32> to vector<8x128xf32>
    %38 = arith.cmpf oeq, %34, %37 : vector<8x128xf32>
    %c128_i32_15 = arith.constant 128 : i32
    %39 = vector.broadcast %c128_i32_15 : i32 to vector<8x128xi32>
    %40 = arith.select %38, %9, %39 : vector<8x128xi1>, vector<8x128xi32>
    %cst_16 = arith.constant dense<2147483647> : vector<8xi32>
    %41 = vector.multi_reduction <minsi>, %40, %cst_16 [1] : vector<8x128xi32> to vector<8xi32>
    %42 = vector.shape_cast %41 : vector<8xi32> to vector<8x1xi32>
    %43 = vector.broadcast %42 : vector<8x1xi32> to vector<8x128xi32>
    %44 = arith.cmpi eq, %9, %43 : vector<8x128xi32>
    %45 = arith.addf %36, %8 : vector<8x1xf32>
    %cst_17 = arith.constant 0.000000e+00 : f32
    %46 = vector.broadcast %cst_17 : f32 to vector<8x1xf32>
    %47 = arith.maximumf %45, %46 : vector<8x1xf32>
    %cst_18 = arith.constant 1.000000e-03 : f32
    %48 = vector.broadcast %cst_18 : f32 to vector<8x1xf32>
    %49 = arith.addf %47, %48 : vector<8x1xf32>
    %cst_19 = arith.constant 1.000000e+00 : f32
    %50 = vector.broadcast %cst_19 : f32 to vector<8x1xf32>
    %51 = arith.divf %50, %49 : vector<8x1xf32>
    %52 = arith.addf %29, %51 : vector<8x1xf32>
    %53 = vector.shape_cast %51 : vector<8x1xf32> to vector<8x1xf32>
    %54 = vector.broadcast %53 : vector<8x1xf32> to vector<8x128xf32>
    %55 = arith.select %44, %54, %32 : vector<8x128xi1>, vector<8x128xf32>
    %cst_20 = arith.constant 0x7F800000 : f32
    %56 = vector.broadcast %cst_20 : f32 to vector<8x128xf32>
    %57 = arith.select %44, %56, %34 : vector<8x128xi1>, vector<8x128xf32>
    %cst_21 = arith.constant dense<0x7F800000> : vector<8xf32>
    %58 = vector.multi_reduction <minimumf>, %57, %cst_21 [1] : vector<8x128xf32> to vector<8xf32>
    %59 = vector.shape_cast %58 : vector<8xf32> to vector<8x1xf32>
    %60 = vector.broadcast %59 : vector<8x1xf32> to vector<8x128xf32>
    %61 = arith.cmpf oeq, %57, %60 : vector<8x128xf32>
    %c128_i32_22 = arith.constant 128 : i32
    %62 = vector.broadcast %c128_i32_22 : i32 to vector<8x128xi32>
    %63 = arith.select %61, %9, %62 : vector<8x128xi1>, vector<8x128xi32>
    %cst_23 = arith.constant dense<2147483647> : vector<8xi32>
    %64 = vector.multi_reduction <minsi>, %63, %cst_23 [1] : vector<8x128xi32> to vector<8xi32>
    %65 = vector.shape_cast %64 : vector<8xi32> to vector<8x1xi32>
    %66 = vector.broadcast %65 : vector<8x1xi32> to vector<8x128xi32>
    %67 = arith.cmpi eq, %9, %66 : vector<8x128xi32>
    %68 = arith.addf %59, %8 : vector<8x1xf32>
    %cst_24 = arith.constant 0.000000e+00 : f32
    %69 = vector.broadcast %cst_24 : f32 to vector<8x1xf32>
    %70 = arith.maximumf %68, %69 : vector<8x1xf32>
    %cst_25 = arith.constant 1.000000e-03 : f32
    %71 = vector.broadcast %cst_25 : f32 to vector<8x1xf32>
    %72 = arith.addf %70, %71 : vector<8x1xf32>
    %cst_26 = arith.constant 1.000000e+00 : f32
    %73 = vector.broadcast %cst_26 : f32 to vector<8x1xf32>
    %74 = arith.divf %73, %72 : vector<8x1xf32>
    %75 = arith.addf %52, %74 : vector<8x1xf32>
    %76 = vector.shape_cast %74 : vector<8x1xf32> to vector<8x1xf32>
    %77 = vector.broadcast %76 : vector<8x1xf32> to vector<8x128xf32>
    %78 = arith.select %67, %77, %55 : vector<8x128xi1>, vector<8x128xf32>
    %cst_27 = arith.constant 0x7F800000 : f32
    %79 = vector.broadcast %cst_27 : f32 to vector<8x128xf32>
    %80 = arith.select %67, %79, %57 : vector<8x128xi1>, vector<8x128xf32>
    %cst_28 = arith.constant dense<0x7F800000> : vector<8xf32>
    %81 = vector.multi_reduction <minimumf>, %80, %cst_28 [1] : vector<8x128xf32> to vector<8xf32>
    %82 = vector.shape_cast %81 : vector<8xf32> to vector<8x1xf32>
    %83 = vector.broadcast %82 : vector<8x1xf32> to vector<8x128xf32>
    %84 = arith.cmpf oeq, %80, %83 : vector<8x128xf32>
    %c128_i32_29 = arith.constant 128 : i32
    %85 = vector.broadcast %c128_i32_29 : i32 to vector<8x128xi32>
    %86 = arith.select %84, %9, %85 : vector<8x128xi1>, vector<8x128xi32>
    %cst_30 = arith.constant dense<2147483647> : vector<8xi32>
    %87 = vector.multi_reduction <minsi>, %86, %cst_30 [1] : vector<8x128xi32> to vector<8xi32>
    %88 = vector.shape_cast %87 : vector<8xi32> to vector<8x1xi32>
    %89 = vector.broadcast %88 : vector<8x1xi32> to vector<8x128xi32>
    %90 = arith.cmpi eq, %9, %89 : vector<8x128xi32>
    %91 = arith.addf %82, %8 : vector<8x1xf32>
    %cst_31 = arith.constant 0.000000e+00 : f32
    %92 = vector.broadcast %cst_31 : f32 to vector<8x1xf32>
    %93 = arith.maximumf %91, %92 : vector<8x1xf32>
    %cst_32 = arith.constant 1.000000e-03 : f32
    %94 = vector.broadcast %cst_32 : f32 to vector<8x1xf32>
    %95 = arith.addf %93, %94 : vector<8x1xf32>
    %cst_33 = arith.constant 1.000000e+00 : f32
    %96 = vector.broadcast %cst_33 : f32 to vector<8x1xf32>
    %97 = arith.divf %96, %95 : vector<8x1xf32>
    %98 = arith.addf %75, %97 : vector<8x1xf32>
    %99 = vector.shape_cast %97 : vector<8x1xf32> to vector<8x1xf32>
    %100 = vector.broadcast %99 : vector<8x1xf32> to vector<8x128xf32>
    %101 = arith.select %90, %100, %78 : vector<8x128xi1>, vector<8x128xf32>
    %cst_34 = arith.constant 0x7F800000 : f32
    %102 = vector.broadcast %cst_34 : f32 to vector<8x128xf32>
    %103 = arith.select %90, %102, %80 : vector<8x128xi1>, vector<8x128xf32>
    %cst_35 = arith.constant dense<0x7F800000> : vector<8xf32>
    %104 = vector.multi_reduction <minimumf>, %103, %cst_35 [1] : vector<8x128xf32> to vector<8xf32>
    %105 = vector.shape_cast %104 : vector<8xf32> to vector<8x1xf32>
    %106 = vector.broadcast %105 : vector<8x1xf32> to vector<8x128xf32>
    %107 = arith.cmpf oeq, %103, %106 : vector<8x128xf32>
    %c128_i32_36 = arith.constant 128 : i32
    %108 = vector.broadcast %c128_i32_36 : i32 to vector<8x128xi32>
    %109 = arith.select %107, %9, %108 : vector<8x128xi1>, vector<8x128xi32>
    %cst_37 = arith.constant dense<2147483647> : vector<8xi32>
    %110 = vector.multi_reduction <minsi>, %109, %cst_37 [1] : vector<8x128xi32> to vector<8xi32>
    %111 = vector.shape_cast %110 : vector<8xi32> to vector<8x1xi32>
    %112 = vector.broadcast %111 : vector<8x1xi32> to vector<8x128xi32>
    %113 = arith.cmpi eq, %9, %112 : vector<8x128xi32>
    %114 = arith.addf %105, %8 : vector<8x1xf32>
    %cst_38 = arith.constant 0.000000e+00 : f32
    %115 = vector.broadcast %cst_38 : f32 to vector<8x1xf32>
    %116 = arith.maximumf %114, %115 : vector<8x1xf32>
    %cst_39 = arith.constant 1.000000e-03 : f32
    %117 = vector.broadcast %cst_39 : f32 to vector<8x1xf32>
    %118 = arith.addf %116, %117 : vector<8x1xf32>
    %cst_40 = arith.constant 1.000000e+00 : f32
    %119 = vector.broadcast %cst_40 : f32 to vector<8x1xf32>
    %120 = arith.divf %119, %118 : vector<8x1xf32>
    %121 = arith.addf %98, %120 : vector<8x1xf32>
    %122 = vector.shape_cast %120 : vector<8x1xf32> to vector<8x1xf32>
    %123 = vector.broadcast %122 : vector<8x1xf32> to vector<8x128xf32>
    %124 = arith.select %113, %123, %101 : vector<8x128xi1>, vector<8x128xf32>
    %c0_41 = arith.constant 0 : index
    %c0_42 = arith.constant 0 : index
    %125 = vector.load %arg4[%c0_41, %c0_42] : memref<128x128xf32, #tpu.memory_space<vmem>>, vector<128x128xf32>
    %cst_43 = arith.constant dense<0.000000e+00> : vector<8x128xf32>
    %126 = tpu.matmul %124, %125, %cst_43 {dimension_numbers = #tpu.dot_dimension_numbers<[1], [0], [0], [1], [0, 0, 1, 1], [], []>} : vector<8x128xf32>, vector<128x128xf32>, vector<8x128xf32> -> vector<8x128xf32>
    %127 = tpu.reciprocal %121 : vector<8x1xf32> -> vector<8x1xf32>
    %128 = vector.broadcast %127 : vector<8x1xf32> to vector<8x128xf32>
    %129 = arith.mulf %126, %128 : vector<8x128xf32>
    %c0_44 = arith.constant 0 : index
    %c0_45 = arith.constant 0 : index
    %130 = vector.load %arg5[%c0_44, %c0_45] : memref<8x128xf32, #tpu.memory_space<vmem>>, vector<8x128xf32>
    tpu.vector_store %arg5[%c0_44, %c0_45], %129 {strides = array<i32>} : memref<8x128xf32, #tpu.memory_space<vmem>>, vector<8x128xf32>,
    return
  }
  func.func @transform_0(%arg0: i32) -> (i32, i32) {
    %c0_i32 = arith.constant 0 : i32
    %c0_i32_0 = arith.constant 0 : i32
    return %arg0, %c0_i32 : i32, i32
  }
  func.func @transform_1(%arg0: i32) -> (i32, i32) {
    %c0_i32 = arith.constant 0 : i32
    %c0_i32_0 = arith.constant 0 : i32
    %c0_i32_1 = arith.constant 0 : i32
    return %c0_i32, %c0_i32_0 : i32, i32
  }
  func.func @transform_2(%arg0: i32) -> (i32, i32) {
    %c0_i32 = arith.constant 0 : i32
    %c0_i32_0 = arith.constant 0 : i32
    %c0_i32_1 = arith.constant 0 : i32
    return %c0_i32, %c0_i32_0 : i32, i32
  }
  func.func @transform_3(%arg0: i32) -> (i32, i32) {
    %c0_i32 = arith.constant 0 : i32
    %c0_i32_0 = arith.constant 0 : i32
    %c0_i32_1 = arith.constant 0 : i32
    return %c0_i32, %c0_i32_0 : i32, i32
  }
  func.func @transform_4(%arg0: i32) -> (i32, i32) {
    %c0_i32 = arith.constant 0 : i32
    %c0_i32_0 = arith.constant 0 : i32
    return %arg0, %c0_i32 : i32, i32
  }
}

</mosaic_0001>

<llo_original>
// kernel: tpu_custom_call.1
$region0: #{tpu_custom_call.1}
  #allocation0 [shape = 'u32[]', space=smem, size = 0x4, offset = 0x4, fixed_abs, tag = 'smem constant byte address 0x4 - core index']
  #allocation1 [shape = 'u32[144,128]{1,0:T(1,128)}', space=vmem, size = 0x12000, scoped, tag = 'internal scratch']
  %s0 = inlined_call_operand.vmem [shape: f32[16,8], index: 0, kind: input, shape index: {}]
  %s1 = inlined_call_operand.vmem [shape: f32[8,128], index: 1, kind: input, shape index: {}]
  %s2 = inlined_call_operand.vmem [shape: f32[1,128], index: 2, kind: input, shape index: {}]
  %s3 = inlined_call_operand.hbm [shape: f32[128,128], index: 3, kind: input, shape index: {}]
  %s4 = inlined_call_operand.hbm [shape: f32[16,128], index: 4, kind: output, shape index: {}]
  %s5 = sld [smem:[#allocation0]]
  $region53: #{tpu_custom_call.1} parent=0
    _
  %s7 = ssub.s32 1, %s5
  %s8 = scalar_select 0, %s7, %s5
  $region1: #{tpu_custom_call.1} parent=0
    #allocation2 [shape = 'u8[65536]{0}', space=vmem, size = 0x10000, scoped, tag = 'input window, operand 3, single buffered']
    #allocation3 [shape = 's32[2]{0}', space=sflag, size = 0x8, scoped, tag = 'scoped memory for tpu_custom_call.1']
    #allocation4 [shape = 's32[2]{0}', space=sflag, size = 0x8, scoped, tag = 'scoped memory for tpu_custom_call.1']
    #allocation5 [shape = 'u8[8192]{0}', space=vmem, size = 0x2000, scoped, tag = 'output window, operand 0']
    %9 = vsyncpa [#allocation3], 0
    %10 = vsyncpa [#allocation4], 0
    %s11 = scalar_lea.sflag [#allocation4], 1
    %12 = vsyncpa %s11, 0
    loop: start=0, step=1, limit=4
    $region2: #{tpu_custom_call.1} parent=1 // loop_pre_header
      _
    $region3: #{tpu_custom_call.1} parent=1 // loop_header
      %s14 = sphi 0, %s18
      %p15 = scmp.ge.s32.totalorder %s14, 4
      %s24 = sphi 0, %s26
      %s27 = sphi 0, %s24
      %s28 = sphi 0, %s27
      %s44 = sphi 0, %s28
      %s48 = sphi 0, %s48
      %s50 = sphi 0, %s48
      %s51 = sphi 0, %s50
      %s65 = sphi 0, %s51
      %s69 = sphi 0, %s69
      %s71 = sphi 0, %s69
      %s72 = sphi 0, %s71
      %s86 = sphi 0, %s72
      %s90 = sphi 0, %s90
      %s92 = sphi 0, %s90
      %s93 = sphi 0, %s92
      %s107 = sphi 0, %s93
      %s113 = sphi 0, %s115
      %s116 = sphi 0, %s113
      %s117 = sphi 0, %s116
      %s133 = sphi 0, %s117
    $region4: #{tpu_custom_call.1} parent=1 // loop_header_branch
      %17 = sbr.rel (%p15) target = $region8
    $region5: #{tpu_custom_call.1} parent=1 // loop_body
      %s19 = ssub.s32 %s14, 1
      %s20 = ssub.s32 %s14, 2
      %s21 = sadd.s32 %s14, 1
      %s22 = ssub.s32 %s14, %s21
      %p23 = scmp.eq.s32.totalorder %s22, 0
      %s25 = sadd.s32 %s24, 1
      %s26 = scalar_select %p23, %s24, %s25
      %p29 = pneg %p23
      %p30 = scmp.eq.s32.totalorder %s14, 1
      %p31 = por %p29, %p30
      %p32 = scmp.ne.s32.totalorder %s24, %s27
      %p33 = scmp.eq.s32.totalorder %s14, 0
      %p34 = por %p32, %p33
      %p35 = scmp.ne.s32.totalorder %s24, %s27
      %p36 = scmp.eq.s32.totalorder %s19, 1
      %p37 = por %p35, %p36
      %p38 = scmp.ne.s32.totalorder %s27, %s28
      %p39 = scmp.eq.s32.totalorder %s19, 0
      %p40 = por %p38, %p39
      %p41 = scmp.ne.s32.totalorder %s27, %s28
      %p42 = scmp.eq.s32.totalorder %s20, 1
      %p43 = por %p41, %p42
      %p45 = scmp.ne.s32.totalorder %s28, %s44
      %p46 = scmp.eq.s32.totalorder %s20, 0
      %p47 = por %p45, %p46
      %s49 = sadd.s32 %s48, 1
      %p52 = scmp.eq.s32.totalorder %s14, 1
      %p53 = scmp.ne.s32.totalorder %s48, %s50
      %p54 = scmp.eq.s32.totalorder %s14, 0
      %p55 = por %p53, %p54
      %p56 = scmp.ne.s32.totalorder %s48, %s50
      %p57 = scmp.eq.s32.totalorder %s19, 1
      %p58 = por %p56, %p57
      %p59 = scmp.ne.s32.totalorder %s50, %s51
      %p60 = scmp.eq.s32.totalorder %s19, 0
      %p61 = por %p59, %p60
      %p62 = scmp.ne.s32.totalorder %s50, %s51
      %p63 = scmp.eq.s32.totalorder %s20, 1
      %p64 = por %p62, %p63
      %p66 = scmp.ne.s32.totalorder %s51, %s65
      %p67 = scmp.eq.s32.totalorder %s20, 0
      %p68 = por %p66, %p67
      %s70 = sadd.s32 %s69, 1
      %p73 = scmp.eq.s32.totalorder %s14, 1
      %p74 = scmp.ne.s32.totalorder %s69, %s71
      %p75 = scmp.eq.s32.totalorder %s14, 0
      %p76 = por %p74, %p75
      %p77 = scmp.ne.s32.totalorder %s69, %s71
      %p78 = scmp.eq.s32.totalorder %s19, 1
      %p79 = por %p77, %p78
      %p80 = scmp.ne.s32.totalorder %s71, %s72
      %p81 = scmp.eq.s32.totalorder %s19, 0
      %p82 = por %p80, %p81
      %p83 = scmp.ne.s32.totalorder %s71, %s72
      %p84 = scmp.eq.s32.totalorder %s20, 1
      %p85 = por %p83, %p84
      %p87 = scmp.ne.s32.totalorder %s72, %s86
      %p88 = scmp.eq.s32.totalorder %s20, 0
      %p89 = por %p87, %p88
      %s91 = sadd.s32 %s90, 1
      %p94 = scmp.eq.s32.totalorder %s14, 1
      %p95 = scmp.ne.s32.totalorder %s90, %s92
      %p96 = scmp.eq.s32.totalorder %s14, 0
      %p97 = por %p95, %p96
      %p98 = scmp.ne.s32.totalorder %s90, %s92
      %p99 = scmp.eq.s32.totalorder %s19, 1
      %p100 = por %p98, %p99
      %p101 = scmp.ne.s32.totalorder %s92, %s93
      %p102 = scmp.eq.s32.totalorder %s19, 0
      %p103 = por %p101, %p102
      %p104 = scmp.ne.s32.totalorder %s92, %s93
      %p105 = scmp.eq.s32.totalorder %s20, 1
      %p106 = por %p104, %p105
      %p108 = scmp.ne.s32.totalorder %s93, %s107
      %p109 = scmp.eq.s32.totalorder %s20, 0
      %p110 = por %p108, %p109
      %s111 = ssub.s32 %s14, %s21
      %p112 = scmp.eq.s32.totalorder %s111, 0
      %s114 = sadd.s32 %s113, 1
      %s115 = scalar_select %p112, %s113, %s114
      %p118 = pneg %p112
      %p119 = scmp.eq.s32.totalorder %s14, 1
      %p120 = por %p118, %p119
      %p121 = scmp.ne.s32.totalorder %s113, %s116
      %p122 = scmp.eq.s32.totalorder %s14, 0
      %p123 = por %p121, %p122
      %p124 = scmp.ne.s32.totalorder %s113, %s116
      %p125 = scmp.eq.s32.totalorder %s19, 1
      %p126 = por %p124, %p125
      %p127 = scmp.ne.s32.totalorder %s116, %s117
      %p128 = scmp.eq.s32.totalorder %s19, 0
      %p129 = por %p127, %p128
      %p130 = scmp.ne.s32.totalorder %s116, %s117
      %p131 = scmp.eq.s32.totalorder %s20, 1
      %p132 = por %p130, %p131
      %p134 = scmp.ne.s32.totalorder %s117, %s133
      %p135 = scmp.eq.s32.totalorder %s20, 0
      %p136 = por %p134, %p135
      %p137 = scmp.le.s32.totalorder 1, %s14
      %p138 = scmp.lt.s32.totalorder %s14, 3
      %p139 = pnand %p137, %p138
      %p140 = pneg %p139
      // Predicated region
      $region9: #{tpu_custom_call.1} parent=5 // pred_check
        _
      $region10: #{tpu_custom_call.1} parent=5 // pred_check_branch
        %142 = sbr.rel (%p139) target = $region12
      $region11: #{tpu_custom_call.1} parent=5 // pred_region
        %s143 = ssub.s32 %s14, 1
        // Predicated region
        $region13: #{tpu_custom_call.1} parent=11 // pred_check
          %p144 = pneg %p61
        $region14: #{tpu_custom_call.1} parent=11 // pred_check_branch
          %146 = sbr.rel (%p144) target = $region16
        $region15: #{tpu_custom_call.1} parent=11 // pred_region
          _
        $region16: #{tpu_custom_call.1} parent=11 // pred_fallthru
          _
        // Predicated region
        $region17: #{tpu_custom_call.1} parent=11 // pred_check
          %p147 = pneg %p82
        $region18: #{tpu_custom_call.1} parent=11 // pred_check_branch
          %149 = sbr.rel (%p147) target = $region20
        $region19: #{tpu_custom_call.1} parent=11 // pred_region
          _
        $region20: #{tpu_custom_call.1} parent=11 // pred_fallthru
          _
        // Predicated region
        $region21: #{tpu_custom_call.1} parent=11 // pred_check
          %p150 = pneg %p103
        $region22: #{tpu_custom_call.1} parent=11 // pred_check_branch
          %152 = sbr.rel (%p150) target = $region24
        $region23: #{tpu_custom_call.1} parent=11 // pred_region
          %s154 = ssub.s32 2048, 2048
          %155 = vsyncadd [#allocation3], %s154
          %s156 = sshll.u32 [#allocation2], 4
          %s157 = int_to_ptr.vmem [resolvable:$true] %s156
          %162 = dma.hbm_to_vmem [thread:$0]  %s3, 2048, %s157, [#allocation3], 128, 128, 8
        $region24: #{tpu_custom_call.1} parent=11 // pred_fallthru
          _
      $region12: #{tpu_custom_call.1} parent=5 // pred_fallthru
        _
      %p163 = scmp.lt.s32.totalorder %s14, 2
      // Predicated region
      $region25: #{tpu_custom_call.1} parent=5 // pred_check
        %p164 = pneg %p163
      $region26: #{tpu_custom_call.1} parent=5 // pred_check_branch
        %166 = sbr.rel (%p164) target = $region28
      $region27: #{tpu_custom_call.1} parent=5 // pred_region
        // Predicated region
        $region29: #{tpu_custom_call.1} parent=27 // pred_check
          %p167 = pneg %p34
        $region30: #{tpu_custom_call.1} parent=27 // pred_check_branch
          %169 = sbr.rel (%p167) target = $region32
        $region31: #{tpu_custom_call.1} parent=27 // pred_region
          %p170 = scmp.lt.s32.totalorder %s14, 1
          %s171 = scalar_select %p170, %s14, 1
          %s172 = smul.addr %s171, 8
          %s173 = scalar_lea.vmem %s0, %s172
        $region32: #{tpu_custom_call.1} parent=27 // pred_fallthru
          _
      $region28: #{tpu_custom_call.1} parent=5 // pred_fallthru
        _
      %p174 = scmp.le.s32.totalorder 1, %s14
      %p175 = scmp.lt.s32.totalorder %s14, 3
      %p176 = pnand %p174, %p175
      %p177 = pneg %p176
      // Predicated region
      $region33: #{tpu_custom_call.1} parent=5 // pred_check
        _
      $region34: #{tpu_custom_call.1} parent=5 // pred_check_branch
        %179 = sbr.rel (%p176) target = $region36
      $region35: #{tpu_custom_call.1} parent=5 // pred_region
        %s180 = ssub.s32 %s14, 1
        // Predicated region
        $region37: #{tpu_custom_call.1} parent=35 // pred_check
          %p181 = pneg %p103
        $region38: #{tpu_custom_call.1} parent=35 // pred_check_branch
          %183 = sbr.rel (%p181) target = $region40
        $region39: #{tpu_custom_call.1} parent=35 // pred_region
          %184 = dma.done [#allocation3], 2048
        $region40: #{tpu_custom_call.1} parent=35 // pred_fallthru
          _
        %p185 = scmp.lt.s32.totalorder %s19, 1
        %s186 = scalar_select %p185, %s19, 1
        %s187 = smul.addr %s186, 8
        %s188 = scalar_lea.vmem %s0, %s187
        %p189 = pneg %p40
        %p190 = pneg %p37
        %p191 = pneg %p61
        %p192 = pneg %p58
        %p193 = pneg %p82
        %p194 = pneg %p79
        %p195 = pneg %p103
        %p196 = pneg %p100
        %p197 = pneg %p129
        %p198 = pneg %p126
        %s199 = sand.u32 %s116, 1
        %s200 = scalar_lea.sflag [#allocation4], %s199
        %s201 = sand.u32 %s116, 1
        %s202 = smul.addr %s201, 8
        %s203 = scalar_lea.vmem [#allocation5], %s202
        %p204 = scmp.lt.s32.totalorder %s19, 1
        %s205 = scalar_select %p204, %s19, 1
        %s206 = smul.addr %s205, 8
        %s207 = scalar_lea.vmem %s0, %s206
        %v208 = vld [vmem:[%s207] sm:$0xff]
        %v209 = vld [vmem:[%s1] sm:$0xff]
        %v210 = vld [vmem:[%s2] sm:$0x1]
        %vm211 = vcmask 64512
        %v213 = vsel %vm211, %v208, 0
        %215 = vmatprep.subr.mxu0 0.0
        %216 = vmatpush1.msra.mxu0 %v209
        %217 = vmatprep.subr.mxu0 0.0
        %218 = vmatpush1.msra.mxu0 0.0
        %219 = vmatprep.subr.mxu0 0.0
        %220 = vmatpush1.msra.mxu0 0.0
        %221 = vmatprep.subr.mxu0 0.0
        %222 = vmatpush1.msra.mxu0 0.0
        %223 = vmatprep.subr.mxu0 0.0
        %224 = vmatpush1.msra.mxu0 0.0
        %225 = vmatprep.subr.mxu0 0.0
        %226 = vmatpush1.msra.mxu0 0.0
        %227 = vmatprep.subr.mxu0 0.0
        %228 = vmatpush1.msra.mxu0 0.0
        %229 = vmatprep.subr.mxu0 0.0
        %230 = vmatpush1.msra.mxu0 0.0
        %231 = vmatprep.subr.mxu0 0.0
        %232 = vmatpush1.msra.mxu0 0.0
        %233 = vmatprep.subr.mxu0 0.0
        %234 = vmatpush1.msra.mxu0 0.0
        %235 = vmatprep.subr.mxu0 0.0
        %236 = vmatpush1.msra.mxu0 0.0
        %237 = vmatprep.subr.mxu0 0.0
        %238 = vmatpush1.msra.mxu0 0.0
        %239 = vmatprep.subr.mxu0 0.0
        %240 = vmatpush1.msra.mxu0 0.0
        %241 = vmatprep.subr.mxu0 0.0
        %242 = vmatpush1.msra.mxu0 0.0
        %243 = vmatprep.subr.mxu0 0.0
        %244 = vmatpush1.msra.mxu0 0.0
        %245 = vmatprep.subr.mxu0 0.0
        %246 = vmatpush1.msra.mxu0 0.0
        %247 = vmatprep.subr.mxu0 0.0
        %248 = vmatpush1.msra.mxu0 0.0
        %249 = vmatprep.subr.mxu0 0.0
        %250 = vmatpush1.msra.mxu0 0.0
        %251 = vmatprep.subr.mxu0 0.0
        %252 = vmatpush1.msra.mxu0 0.0
        %253 = vmatprep.subr.mxu0 0.0
        %254 = vmatpush1.msra.mxu0 0.0
        %255 = vmatprep.subr.mxu0 0.0
        %256 = vmatpush1.msra.mxu0 0.0
        %257 = vmatprep.subr.mxu0 0.0
        %258 = vmatpush1.msra.mxu0 0.0
        %259 = vmatprep.subr.mxu0 0.0
        %260 = vmatpush1.msra.mxu0 0.0
        %261 = vmatprep.subr.mxu0 0.0
        %262 = vmatpush1.msra.mxu0 0.0
        %263 = vmatprep.subr.mxu0 0.0
        %264 = vmatpush1.msra.mxu0 0.0
        %265 = vmatprep.subr.mxu0 0.0
        %266 = vmatpush1.msra.mxu0 0.0
        %267 = vmatprep.subr.mxu0 0.0
        %268 = vmatpush1.msra.mxu0 0.0
        %269 = vmatprep.subr.mxu0 0.0
        %270 = vmatpush1.msra.mxu0 0.0
        %271 = vmatprep.subr.mxu0 0.0
        %272 = vmatpush1.msra.mxu0 0.0
        %273 = vmatprep.subr.mxu0 0.0
        %274 = vmatpush1.msra.mxu0 0.0
        %275 = vmatprep.subr.mxu0 0.0
        %276 = vmatpush1.msra.mxu0 0.0
        %277 = vmatprep.subr.mxu0 0.0
        %278 = vmatpush1.msra.mxu0 0.0
        %279 = vmatprep.mubr.f32.mxu0 0.0
        %280 = vmatmul.mubr.f32.gmra.mrb[0].mxu0 %v213
        %v281 = vpop.f32.mrb[0].mxu0
        %v282 = vadd.f32 0.0, %v281
        %v283 = vpop.f32.mrb[0].mxu0
        %284 = vdwg.mxu0
        %v286 = vlaneseq
        %v287 = vshrl.u32 %v286, 7
        %v288 = vsub.s32 0, %v287
        %v289 = vrot.slane %v210, %v288
        %v291 = vadd.f32 %v289, %v282
        %v292 = vmul.f32 %v208, %v208
        %v293 = vsel %vm211, %v292, 0.0
        %294 = vadd.xlane.f32.xlu0 %v293
        %v295 = vpop.xlane.xlu0 %294
        %v296 = vlaneseq
        %v297 = vand.u32 %v296, 127
        %298 = vmin.xlane.f32.xlu0 %v291
        %v299 = vpop.xlane.xlu0 %298
        %vm300 = vcmp.eq.f32.partialorder %v291, %v299
        %v301 = vsel %vm300, %v297, 128
        %v302 = vand.u32 %v301, 65535
        %v303 = vshra.s32 %v301, 16
        %v304 = vcvt.s32.f32 %v302
        %v305 = vcvt.s32.f32 %v303
        %306 = vmin.xlane.f32.xlu0 %v305
        %v307 = vpop.xlane.xlu0 %306
        %vm308 = vcmp.eq.f32.partialorder %v305, %v307
        %v309 = vsel %vm308, %v304, inf
        %310 = vmin.xlane.f32.xlu0 %v309
        %v311 = vpop.xlane.xlu0 %310
        %v312 = vcvt.f32.s32 %v311
        %v313 = vcvt.f32.s32 %v307
        %v314 = vshll.u32 %v313, 16
        %v315 = vadd.s32 %v314, %v312
        %vm316 = vcmp.eq.s32.totalorder %v297, %v315
        %v317 = vadd.f32 %v299, %v295
        %v318 = vmax.f32 %v317, 0.0
        %v319 = vadd.f32 %v318, 0.001
        %v320 = vrcp.pop %v319
        %v321 = vmul.f32 1.0, %v320
        %v322 = vadd.f32 %v321, 0.0
        %v323 = vsel %vm316, %v321, 0.0
        %v324 = vsel %vm316, inf, %v291
        %325 = vmin.xlane.f32.xlu0 %v324
        %v326 = vpop.xlane.xlu0 %325
        %vm327 = vcmp.eq.f32.partialorder %v324, %v326
        %v328 = vsel %vm327, %v297, 128
        %v329 = vand.u32 %v328, 65535
        %v330 = vshra.s32 %v328, 16
        %v331 = vcvt.s32.f32 %v329
        %v332 = vcvt.s32.f32 %v330
        %333 = vmin.xlane.f32.xlu0 %v332
        %v334 = vpop.xlane.xlu0 %333
        %vm335 = vcmp.eq.f32.partialorder %v332, %v334
        %v336 = vsel %vm335, %v331, inf
        %337 = vmin.xlane.f32.xlu0 %v336
        %v338 = vpop.xlane.xlu0 %337
        %v339 = vcvt.f32.s32 %v338
        %v340 = vcvt.f32.s32 %v334
        %v341 = vshll.u32 %v340, 16
        %v342 = vadd.s32 %v341, %v339
        %vm343 = vcmp.eq.s32.totalorder %v297, %v342
        %v344 = vadd.f32 %v326, %v295
        %v345 = vmax.f32 %v344, 0.0
        %v346 = vadd.f32 %v345, 0.001
        %v347 = vrcp.pop %v346
        %v348 = vmul.f32 1.0, %v347
        %v349 = vadd.f32 %v322, %v348
        %v350 = vsel %vm343, %v348, %v323
        %v351 = vsel %vm343, inf, %v324
        %352 = vmin.xlane.f32.xlu0 %v351
        %v353 = vpop.xlane.xlu0 %352
        %vm354 = vcmp.eq.f32.partialorder %v351, %v353
        %v355 = vsel %vm354, %v297, 128
        %v356 = vand.u32 %v355, 65535
        %v357 = vshra.s32 %v355, 16
        %v358 = vcvt.s32.f32 %v356
        %v359 = vcvt.s32.f32 %v357
        %360 = vmin.xlane.f32.xlu0 %v359
        %v361 = vpop.xlane.xlu0 %360
        %vm362 = vcmp.eq.f32.partialorder %v359, %v361
        %v363 = vsel %vm362, %v358, inf
        %364 = vmin.xlane.f32.xlu0 %v363
        %v365 = vpop.xlane.xlu0 %364
        %v366 = vcvt.f32.s32 %v365
        %v367 = vcvt.f32.s32 %v361
        %v368 = vshll.u32 %v367, 16
        %v369 = vadd.s32 %v368, %v366
        %vm370 = vcmp.eq.s32.totalorder %v297, %v369
        %v371 = vadd.f32 %v353, %v295
        %v372 = vmax.f32 %v371, 0.0
        %v373 = vadd.f32 %v372, 0.001
        %v374 = vrcp.pop %v373
        %v375 = vmul.f32 1.0, %v374
        %v376 = vadd.f32 %v349, %v375
        %v377 = vsel %vm370, %v375, %v350
        %v378 = vsel %vm370, inf, %v351
        %379 = vmin.xlane.f32.xlu0 %v378
        %v380 = vpop.xlane.xlu0 %379
        %vm381 = vcmp.eq.f32.partialorder %v378, %v380
        %v382 = vsel %vm381, %v297, 128
        %v383 = vand.u32 %v382, 65535
        %v384 = vshra.s32 %v382, 16
        %v385 = vcvt.s32.f32 %v383
        %v386 = vcvt.s32.f32 %v384
        %387 = vmin.xlane.f32.xlu0 %v386
        %v388 = vpop.xlane.xlu0 %387
        %vm389 = vcmp.eq.f32.partialorder %v386, %v388
        %v390 = vsel %vm389, %v385, inf
        %391 = vmin.xlane.f32.xlu0 %v390
        %v392 = vpop.xlane.xlu0 %391
        %v393 = vcvt.f32.s32 %v392
        %v394 = vcvt.f32.s32 %v388
        %v395 = vshll.u32 %v394, 16
        %v396 = vadd.s32 %v395, %v393
        %vm397 = vcmp.eq.s32.totalorder %v297, %v396
        %v398 = vadd.f32 %v380, %v295
        %v399 = vmax.f32 %v398, 0.0
        %v400 = vadd.f32 %v399, 0.001
        %v401 = vrcp.pop %v400
        %v402 = vmul.f32 1.0, %v401
        %v403 = vadd.f32 %v376, %v402
        %v404 = vsel %vm397, %v402, %v377
        %v405 = vsel %vm397, inf, %v378
        %406 = vmin.xlane.f32.xlu0 %v405
        %v407 = vpop.xlane.xlu0 %406
        %vm408 = vcmp.eq.f32.partialorder %v405, %v407
        %v409 = vsel %vm408, %v297, 128
        %v410 = vand.u32 %v409, 65535
        %v411 = vshra.s32 %v409, 16
        %v412 = vcvt.s32.f32 %v410
        %v413 = vcvt.s32.f32 %v411
        %414 = vmin.xlane.f32.xlu0 %v413
        %v415 = vpop.xlane.xlu0 %414
        %vm416 = vcmp.eq.f32.partialorder %v413, %v415
        %v417 = vsel %vm416, %v412, inf
        %418 = vmin.xlane.f32.xlu0 %v417
        %v419 = vpop.xlane.xlu0 %418
        %v420 = vcvt.f32.s32 %v419
        %v421 = vcvt.f32.s32 %v415
        %v422 = vshll.u32 %v421, 16
        %v423 = vadd.s32 %v422, %v420
        %vm424 = vcmp.eq.s32.totalorder %v297, %v423
        %v425 = vadd.f32 %v407, %v295
        %v426 = vmax.f32 %v425, 0.0
        %v427 = vadd.f32 %v426, 0.001
        %v428 = vrcp.pop %v427
        %v429 = vmul.f32 1.0, %v428
        %v430 = vadd.f32 %v403, %v429
        %v431 = vsel %vm424, %v429, %v404
        %v432 = vld [vmem:[#allocation2] sm:$0xff]
        %v433 = vld [vmem:[#allocation2 + $0x8] sm:$0xff]
        %v434 = vld [vmem:[#allocation2 + $0x10] sm:$0xff]
        %v435 = vld [vmem:[#allocation2 + $0x18] sm:$0xff]
        %v436 = vld [vmem:[#allocation2 + $0x20] sm:$0xff]
        %v437 = vld [vmem:[#allocation2 + $0x28] sm:$0xff]
        %v438 = vld [vmem:[#allocation2 + $0x30] sm:$0xff]
        %v439 = vld [vmem:[#allocation2 + $0x38] sm:$0xff]
        %v440 = vld [vmem:[#allocation2 + $0x40] sm:$0xff]
        %v441 = vld [vmem:[#allocation2 + $0x48] sm:$0xff]
        %v442 = vld [vmem:[#allocation2 + $0x50] sm:$0xff]
        %v443 = vld [vmem:[#allocation2 + $0x58] sm:$0xff]
        %v444 = vld [vmem:[#allocation2 + $0x60] sm:$0xff]
        %v445 = vld [vmem:[#allocation2 + $0x68] sm:$0xff]
        %v446 = vld [vmem:[#allocation2 + $0x70] sm:$0xff]
        %v447 = vld [vmem:[#allocation2 + $0x78] sm:$0xff]
        %448 = vmatprep.subr.mxu0 0.0
        %449 = vmatpush1.msra.mxu0 %v432
        %450 = vmatprep.subr.mxu0 0.0
        %451 = vmatpush1.msra.mxu0 %v433
        %452 = vmatprep.subr.mxu0 0.0
        %453 = vmatpush1.msra.mxu0 %v434
        %454 = vmatprep.subr.mxu0 0.0
        %455 = vmatpush1.msra.mxu0 %v435
        %456 = vmatprep.subr.mxu0 0.0
        %457 = vmatpush1.msra.mxu0 %v436
        %458 = vmatprep.subr.mxu0 0.0
        %459 = vmatpush1.msra.mxu0 %v437
        %460 = vmatprep.subr.mxu0 0.0
        %461 = vmatpush1.msra.mxu0 %v438
        %462 = vmatprep.subr.mxu0 0.0
        %463 = vmatpush1.msra.mxu0 %v439
        %464 = vmatprep.subr.mxu0 0.0
        %465 = vmatpush1.msra.mxu0 %v440
        %466 = vmatprep.subr.mxu0 0.0
        %467 = vmatpush1.msra.mxu0 %v441
        %468 = vmatprep.subr.mxu0 0.0
        %469 = vmatpush1.msra.mxu0 %v442
        %470 = vmatprep.subr.mxu0 0.0
        %471 = vmatpush1.msra.mxu0 %v443
        %472 = vmatprep.subr.mxu0 0.0
        %473 = vmatpush1.msra.mxu0 %v444
        %474 = vmatprep.subr.mxu0 0.0
        %475 = vmatpush1.msra.mxu0 %v445
        %476 = vmatprep.subr.mxu0 0.0
        %477 = vmatpush1.msra.mxu0 %v446
        %478 = vmatprep.subr.mxu0 0.0
        %479 = vmatpush1.msra.mxu0 %v447
        %480 = vmatprep.subr.mxu0 0.0
        %481 = vmatpush1.msra.mxu0 0.0
        %482 = vmatprep.subr.mxu0 0.0
        %483 = vmatpush1.msra.mxu0 0.0
        %484 = vmatprep.subr.mxu0 0.0
        %485 = vmatpush1.msra.mxu0 0.0
        %486 = vmatprep.subr.mxu0 0.0
        %487 = vmatpush1.msra.mxu0 0.0
        %488 = vmatprep.subr.mxu0 0.0
        %489 = vmatpush1.msra.mxu0 0.0
        %490 = vmatprep.subr.mxu0 0.0
        %491 = vmatpush1.msra.mxu0 0.0
        %492 = vmatprep.subr.mxu0 0.0
        %493 = vmatpush1.msra.mxu0 0.0
        %494 = vmatprep.subr.mxu0 0.0
        %495 = vmatpush1.msra.mxu0 0.0
        %496 = vmatprep.subr.mxu0 0.0
        %497 = vmatpush1.msra.mxu0 0.0
        %498 = vmatprep.subr.mxu0 0.0
        %499 = vmatpush1.msra.mxu0 0.0
        %500 = vmatprep.subr.mxu0 0.0
        %501 = vmatpush1.msra.mxu0 0.0
        %502 = vmatprep.subr.mxu0 0.0
        %503 = vmatpush1.msra.mxu0 0.0
        %504 = vmatprep.subr.mxu0 0.0
        %505 = vmatpush1.msra.mxu0 0.0
        %506 = vmatprep.subr.mxu0 0.0
        %507 = vmatpush1.msra.mxu0 0.0
        %508 = vmatprep.subr.mxu0 0.0
        %509 = vmatpush1.msra.mxu0 0.0
        %510 = vmatprep.subr.mxu0 0.0
        %511 = vmatpush1.msra.mxu0 0.0
        %512 = vmatprep.mubr.f32.mxu0 0.0
        %513 = vmatmul.mubr.f32.gmra.mrb[0].mxu0 %v431
        %v514 = vpop.f32.mrb[0].mxu0
        %v515 = vadd.f32 0.0, %v514
        %v516 = vpop.f32.mrb[0].mxu0
        %517 = vdwg.mxu0
        %v518 = vrcp.pop %v430
        %v519 = vmul.f32 %v515, %v518
        %520 = vst [vmem:[%s203] sm:$0xff] %v519
        %s521 = sand.u32 %s116, 1
        %s522 = scalar_lea.sflag [#allocation4], %s521
        %s523 = sand.u32 %s116, 1
        %s524 = smul.addr %s523, 8
        %s525 = scalar_lea.vmem [#allocation5], %s524
        // Predicated region
        $region41: #{tpu_custom_call.1} parent=35 // pred_check
          %p526 = pneg %p126
        $region42: #{tpu_custom_call.1} parent=35 // pred_check_branch
          %528 = sbr.rel (%p526) target = $region44
        $region43: #{tpu_custom_call.1} parent=35 // pred_region
          %s530 = ssub.s32 128, 128
          %531 = vsyncadd %s522, %s530
          %s532 = smul.addr %s19, 128
          %s533 = scalar_lea.hbm %s4, %s532
          %s535 = sshll.u32 %s525, 4
          %s536 = int_to_ptr.vmem [resolvable:$true] %s535
          %538 = dma.vmem_to_hbm [thread:$0]  %s536, 128, %s533, %s522
        $region44: #{tpu_custom_call.1} parent=35 // pred_fallthru
          _
      $region36: #{tpu_custom_call.1} parent=5 // pred_fallthru
        _
      %p539 = scmp.le.s32.totalorder 2, %s14
      // Predicated region
      $region45: #{tpu_custom_call.1} parent=5 // pred_check
        %p540 = pneg %p539
      $region46: #{tpu_custom_call.1} parent=5 // pred_check_branch
        %542 = sbr.rel (%p540) target = $region48
      $region47: #{tpu_custom_call.1} parent=5 // pred_region
        %s543 = ssub.s32 %s14, 2
        // Predicated region
        $region49: #{tpu_custom_call.1} parent=47 // pred_check
          %p544 = pneg %p132
        $region50: #{tpu_custom_call.1} parent=47 // pred_check_branch
          %546 = sbr.rel (%p544) target = $region52
        $region51: #{tpu_custom_call.1} parent=47 // pred_region
          %s547 = sand.u32 %s117, 1
          %s548 = scalar_lea.sflag [#allocation4], %s547
          %s549 = sand.u32 %s117, 1
          %s550 = smul.addr %s549, 8
          %s551 = scalar_lea.vmem [#allocation5], %s550
          %552 = dma.done %s548, 128
        $region52: #{tpu_custom_call.1} parent=47 // pred_fallthru
          _
      $region48: #{tpu_custom_call.1} parent=5 // pred_fallthru
        _
    $region6: #{tpu_custom_call.1} parent=1 // loop_footer
      %s18 = sadd.s32 1, %s14
    $region7: #{tpu_custom_call.1} parent=1 // loop_footer_branch
      %13 = sbr.rel target = $region3
    $region8: #{tpu_custom_call.1} parent=1 // loop_exit
      _
    %553 = vsyncpa [#allocation3], 1
    %s554 = scalar_lea.sflag [#allocation3], 1
    %555 = vsyncpa %s554, 1
    %556 = vsyncpa [#allocation4], 1
    %s557 = scalar_lea.sflag [#allocation4], 1
    %558 = vsyncpa %s557, 1

</llo_original>
